<compile_context>
chip_gen: v6e
topology: v6e:2x2x1
jax: 0.10.0
libtpu: 0.0.40
codegen_flags: <defaults>
</compile_context>

<pallas_src>
import jax
import jax.numpy as jnp
from jax.experimental import pallas as pl
from jax.experimental.pallas import tpu as pltpu

LANE = 128
SUBLANE = 8
_TARGET_BLOCK_BYTES = 2 * 1024 * 1024  # per-block target; x4 buffers in flight


def _gsnorm_kernel(x_ref, o_ref):
    # Block shape: (1, 1, interval, tile_rows, 128).
    x = x_ref[...].astype(jnp.float32)             # f32 accumulate (bf16-safe)
    s = jnp.sum(x, axis=2, keepdims=True)          # channel sum -> VPU adds
    inv = pl.reciprocal(s + 0.0001, approx=False)  # one recip per position
    o_ref[...] = (x * inv).astype(o_ref.dtype)


def _choose_tile_rows(num_rows, interval, itemsize):
    # num_rows is always a multiple of 8 (spatial dim padded to 8*128), so a
    # multiple-of-8 tile that evenly divides it always exists (worst case 8).
    bytes_per_row = interval * LANE * itemsize
    tr = max(SUBLANE, _TARGET_BLOCK_BYTES // bytes_per_row)
    tr = max(SUBLANE, (tr // SUBLANE) * SUBLANE)
    tr = min(tr, num_rows)
    while num_rows % tr != 0:
        tr -= SUBLANE
    return tr


def gsnorm3d(x, out_ch, num_group=1):
    """Pallas implementation of GSNorm3d.forward.

    x: (N, C, D, H, W) with C == out_ch. Returns an array of the same
    shape/dtype.
    """
    N, C, D, H, W = x.shape
    assert C == out_ch
    assert out_ch % num_group == 0, "out_ch must be divisible by num_group"
    interval = out_ch // num_group
    S = D * H * W

    # Pad the flattened spatial dim to a multiple of 8*128 so rows are
    # sublane/lane aligned. Padded positions (all-zero channels) only affect
    # their own (discarded) outputs: 0 / (0 + 1e-4) = 0, then sliced off.
    S_pad = pl.cdiv(S, SUBLANE * LANE) * (SUBLANE * LANE)
    R = S_pad // LANE

    xg = x.reshape(N, num_group, interval, S)
    if S_pad != S:
        xg = jnp.pad(xg, ((0, 0), (0, 0), (0, 0), (0, S_pad - S)))
    xg = xg.reshape(N, num_group, interval, R, LANE)

    itemsize = jnp.dtype(x.dtype).itemsize
    tr = _choose_tile_rows(R, interval, itemsize)
    block_bytes = interval * tr * LANE * itemsize
    # Explicit scoped-VMEM limit: enough for 2-deep pipelining of in + out,
    # capped below v7x's 64 MiB physical VMEM.
    vmem_limit = int(min(48 * 2**20, max(32 * 2**20, 6 * block_bytes)))

    block = (1, 1, interval, tr, LANE)
    idx_map = lambda n, g, s: (n, g, 0, s, 0)

    out = pl.pallas_call(
        _gsnorm_kernel,
        out_shape=jax.ShapeDtypeStruct((N, num_group, interval, R, LANE), x.dtype),
        grid_spec=pltpu.PrefetchScalarGridSpec(
            num_scalar_prefetch=0,
            grid=(N, num_group, R // tr),
            in_specs=[pl.BlockSpec(block, idx_map)],
            out_specs=pl.BlockSpec(block, idx_map),
        ),
        compiler_params=pltpu.CompilerParams(
            dimension_semantics=("parallel", "parallel", "parallel"),
            vmem_limit_bytes=vmem_limit,
        ),
    )(xg)

    out = out.reshape(N, num_group, interval, S_pad)
    if S_pad != S:
        out = out[..., :S]
    return out.reshape(N, C, D, H, W)


def gsnorm3d_ref(x, out_ch, num_group=1):
    """Pure-JAX reference mirroring the PyTorch loop."""
    interval = out_ch // num_group
    pieces = []
    start = 0
    for _ in range(num_group):
        chunk = x[:, start:start + interval, ...]
        pieces.append(chunk / (jnp.sum(chunk, axis=1, keepdims=True) + 0.0001))
        start += interval
    return jnp.concatenate(pieces, axis=1)


if __name__ == "__main__":
    # GSNorm3d has no learnable parameters; only (out_ch, num_group) config.
    out_ch = 4
    num_group = 2
    N, C, D, H, W = 2, out_ch, 4, 8, 8  # S = 256, padded to 1024 (8 rows of 128)

    key = jax.random.PRNGKey(0)
    x = jax.random.uniform(key, (N, C, D, H, W), dtype=jnp.float32) + 0.1

    y = jax.block_until_ready(gsnorm3d(x, out_ch=out_ch, num_group=num_group))
    y_ref = gsnorm3d_ref(x, out_ch=out_ch, num_group=num_group)

    assert y.shape == x.shape
    assert jnp.allclose(y, y_ref, atol=1e-6, rtol=1e-5), "mismatch vs reference"

    print("KERNEL_OK")
</pallas_src>

<mosaic_0001>
module attributes {stable_mosaic.version = 11 : i64} {
  func.func @_gsnorm_kernel(%arg0: i32, %arg1: i32, %arg2: i32, %arg3: memref<1x1x2x8x128xf32, #tpu.memory_space<vmem>>, %arg4: memref<1x1x2x8x128xf32, #tpu.memory_space<vmem>>) attributes {dimension_semantics = [#tpu.dimension_semantics<parallel>, #tpu.dimension_semantics<parallel>, #tpu.dimension_semantics<parallel>], iteration_bounds = array<i64: 2, 2, 1>, scalar_prefetch = 0 : i64, scratch_operands = 0 : i64, tpu.core_type = #tpu.core_type<tc>, window_params = [{transform_indices = @transform_0, window_bounds = array<i64: 1, 1, 2, 8, 128>}, {transform_indices = @transform_1, window_bounds = array<i64: 1, 1, 2, 8, 128>}]} {
    %c0 = arith.constant 0 : index
    %c0_0 = arith.constant 0 : index
    %c0_1 = arith.constant 0 : index
    %c0_2 = arith.constant 0 : index
    %c0_3 = arith.constant 0 : index
    %0 = vector.load %arg3[%c0, %c0_0, %c0_1, %c0_2, %c0_3] : memref<1x1x2x8x128xf32, #tpu.memory_space<vmem>>, vector<1x1x2x8x128xf32>
    %cst = arith.constant dense<0.000000e+00> : vector<1x1x8x128xf32>
    %1 = vector.multi_reduction <add>, %0, %cst [2] : vector<1x1x2x8x128xf32> to vector<1x1x8x128xf32>
    %2 = vector.shape_cast %1 : vector<1x1x8x128xf32> to vector<1x1x1x8x128xf32>
    %cst_4 = arith.constant 9.99999974E-5 : f32
    %3 = vector.broadcast %cst_4 : f32 to vector<1x1x1x8x128xf32>
    %4 = arith.addf %2, %3 : vector<1x1x1x8x128xf32>
    %5 = tpu.reciprocal %4 : vector<1x1x1x8x128xf32> -> vector<1x1x1x8x128xf32>
    %6 = vector.broadcast %5 : vector<1x1x1x8x128xf32> to vector<1x1x2x8x128xf32>
    %7 = arith.mulf %0, %6 : vector<1x1x2x8x128xf32>
    %c0_5 = arith.constant 0 : index
    %c0_6 = arith.constant 0 : index
    %c0_7 = arith.constant 0 : index
    %c0_8 = arith.constant 0 : index
    %c0_9 = arith.constant 0 : index
    %8 = vector.load %arg4[%c0_5, %c0_6, %c0_7, %c0_8, %c0_9] : memref<1x1x2x8x128xf32, #tpu.memory_space<vmem>>, vector<1x1x2x8x128xf32>
    tpu.vector_store %arg4[%c0_5, %c0_6, %c0_7, %c0_8, %c0_9], %7 {strides = array<i32>} : memref<1x1x2x8x128xf32, #tpu.memory_space<vmem>>, vector<1x1x2x8x128xf32>,
    return
  }
  func.func @transform_0(%arg0: i32, %arg1: i32, %arg2: i32) -> (i32, i32, i32, i32, i32) {
    %c0_i32 = arith.constant 0 : i32
    %c0_i32_0 = arith.constant 0 : i32
    %c0_i32_1 = arith.constant 0 : i32
    return %arg0, %arg1, %c0_i32, %arg2, %c0_i32_0 : i32, i32, i32, i32, i32
  }
  func.func @transform_1(%arg0: i32, %arg1: i32, %arg2: i32) -> (i32, i32, i32, i32, i32) {
    %c0_i32 = arith.constant 0 : i32
    %c0_i32_0 = arith.constant 0 : i32
    %c0_i32_1 = arith.constant 0 : i32
    return %arg0, %arg1, %c0_i32, %arg2, %c0_i32_0 : i32, i32, i32, i32, i32
  }
}

</mosaic_0001>

<llo_original>
// kernel: tpu_custom_call.1
$region0: #{tpu_custom_call.1}
  #allocation0 [shape = 'u32[]', space=smem, size = 0x4, offset = 0x4, fixed_abs, tag = 'smem constant byte address 0x4 - core index']
  #allocation1 [shape = 'u32[144,128]{1,0:T(1,128)}', space=vmem, size = 0x12000, scoped, tag = 'internal scratch']
  %s0 = inlined_call_operand.hbm [shape: f32[2,2,2,8,128], index: 0, kind: input, shape index: {}]
  %s1 = inlined_call_operand.hbm [shape: f32[2,2,2,8,128], index: 1, kind: output, shape index: {}]
  %s2 = sld [smem:[#allocation0]]
  $region41: #{tpu_custom_call.1} parent=0
    _
  %s4 = ssub.s32 1, %s2
  %s5 = scalar_select 0, %s4, %s2
  $region1: #{tpu_custom_call.1} parent=0
    #allocation2 [shape = 'u8[16384]{0}', space=vmem, size = 0x4000, scoped, tag = 'input window, operand 0']
    #allocation3 [shape = 's32[2]{0}', space=sflag, size = 0x8, scoped, tag = 'scoped memory for tpu_custom_call.1']
    #allocation4 [shape = 's32[2]{0}', space=sflag, size = 0x8, scoped, tag = 'scoped memory for tpu_custom_call.1']
    #allocation5 [shape = 'u8[16384]{0}', space=vmem, size = 0x4000, scoped, tag = 'output window, operand 0']
    %6 = vsyncpa [#allocation3], 0
    %s7 = scalar_lea.sflag [#allocation3], 1
    %8 = vsyncpa %s7, 0
    %9 = vsyncpa [#allocation4], 0
    %s10 = scalar_lea.sflag [#allocation4], 1
    %11 = vsyncpa %s10, 0
    loop: start=0, step=1, limit=6
    $region2: #{tpu_custom_call.1} parent=1 // loop_pre_header
      _
    $region3: #{tpu_custom_call.1} parent=1 // loop_header
      %s13 = sphi 0, %s17
      %p14 = scmp.ge.s32.totalorder %s13, 6
      %s20 = sphi 0, %s39
      %s21 = sphi 0, %s35
      %s22 = sphi 0, %s31
      %s23 = sphi 0, %s20
      %s24 = sphi 0, %s21
      %s25 = sphi 0, %s22
      %s26 = sphi 0, %s23
      %s27 = sphi 0, %s24
      %s28 = sphi 0, %s25
      %s46 = sphi 0, %s48
      %s49 = sphi 0, %s46
      %s50 = sphi 0, %s49
      %s66 = sphi 0, %s50
      %s76 = sphi 0, %s78
      %s79 = sphi 0, %s76
      %s80 = sphi 0, %s79
      %s96 = sphi 0, %s80
    $region4: #{tpu_custom_call.1} parent=1 // loop_header_branch
      %16 = sbr.rel (%p14) target = $region8
    $region5: #{tpu_custom_call.1} parent=1 // loop_body
      %s18 = ssub.s32 %s13, 1
      %s19 = ssub.s32 %s13, 2
      %s29 = sadd.s32 1, %s22
      %p30 = scmp.ge.s32.totalorder %s29, 1
      %s31 = scalar_select %p30, 0, %s29
      %s32 = sadd.s32 1, %s21
      %s33 = scalar_select %p30, %s32, %s21
      %p34 = scmp.ge.s32.totalorder %s33, 2
      %s35 = scalar_select %p34, 0, %s33
      %s36 = sadd.s32 1, %s20
      %s37 = scalar_select %p34, %s36, %s20
      %p38 = scmp.ge.s32.totalorder %s37, 2
      %s39 = scalar_select %p38, 0, %s37
      %s40 = ssub.s32 %s20, %s39
      %s41 = ssub.s32 %s21, %s35
      %s42 = sor.u32 %s40, %s41
      %s43 = ssub.s32 %s22, %s31
      %s44 = sor.u32 %s42, %s43
      %p45 = scmp.eq.s32.totalorder %s44, 0
      %s47 = sadd.s32 %s46, 1
      %s48 = scalar_select %p45, %s46, %s47
      %p51 = pneg %p45
      %p52 = scmp.eq.s32.totalorder %s13, 3
      %p53 = por %p51, %p52
      %p54 = scmp.ne.s32.totalorder %s46, %s49
      %p55 = scmp.eq.s32.totalorder %s13, 0
      %p56 = por %p54, %p55
      %p57 = scmp.ne.s32.totalorder %s46, %s49
      %p58 = scmp.eq.s32.totalorder %s18, 3
      %p59 = por %p57, %p58
      %p60 = scmp.ne.s32.totalorder %s49, %s50
      %p61 = scmp.eq.s32.totalorder %s18, 0
      %p62 = por %p60, %p61
      %p63 = scmp.ne.s32.totalorder %s49, %s50
      %p64 = scmp.eq.s32.totalorder %s19, 3
      %p65 = por %p63, %p64
      %p67 = scmp.ne.s32.totalorder %s50, %s66
      %p68 = scmp.eq.s32.totalorder %s19, 0
      %p69 = por %p67, %p68
      %s70 = ssub.s32 %s20, %s39
      %s71 = ssub.s32 %s21, %s35
      %s72 = sor.u32 %s70, %s71
      %s73 = ssub.s32 %s22, %s31
      %s74 = sor.u32 %s72, %s73
      %p75 = scmp.eq.s32.totalorder %s74, 0
      %s77 = sadd.s32 %s76, 1
      %s78 = scalar_select %p75, %s76, %s77
      %p81 = pneg %p75
      %p82 = scmp.eq.s32.totalorder %s13, 3
      %p83 = por %p81, %p82
      %p84 = scmp.ne.s32.totalorder %s76, %s79
      %p85 = scmp.eq.s32.totalorder %s13, 0
      %p86 = por %p84, %p85
      %p87 = scmp.ne.s32.totalorder %s76, %s79
      %p88 = scmp.eq.s32.totalorder %s18, 3
      %p89 = por %p87, %p88
      %p90 = scmp.ne.s32.totalorder %s79, %s80
      %p91 = scmp.eq.s32.totalorder %s18, 0
      %p92 = por %p90, %p91
      %p93 = scmp.ne.s32.totalorder %s79, %s80
      %p94 = scmp.eq.s32.totalorder %s19, 3
      %p95 = por %p93, %p94
      %p97 = scmp.ne.s32.totalorder %s80, %s96
      %p98 = scmp.eq.s32.totalorder %s19, 0
      %p99 = por %p97, %p98
      %p100 = scmp.le.s32.totalorder 1, %s13
      %p101 = scmp.lt.s32.totalorder %s13, 5
      %p102 = pnand %p100, %p101
      %p103 = pneg %p102
      // Predicated region
      $region9: #{tpu_custom_call.1} parent=5 // pred_check
        _
      $region10: #{tpu_custom_call.1} parent=5 // pred_check_branch
        %105 = sbr.rel (%p102) target = $region12
      $region11: #{tpu_custom_call.1} parent=5 // pred_region
        %s106 = ssub.s32 %s13, 1
      $region12: #{tpu_custom_call.1} parent=5 // pred_fallthru
        _
      %p107 = scmp.lt.s32.totalorder %s13, 4
      // Predicated region
      $region13: #{tpu_custom_call.1} parent=5 // pred_check
        %p108 = pneg %p107
      $region14: #{tpu_custom_call.1} parent=5 // pred_check_branch
        %110 = sbr.rel (%p108) target = $region16
      $region15: #{tpu_custom_call.1} parent=5 // pred_region
        // Predicated region
        $region17: #{tpu_custom_call.1} parent=15 // pred_check
          %p111 = pneg %p56
        $region18: #{tpu_custom_call.1} parent=15 // pred_check_branch
          %113 = sbr.rel (%p111) target = $region20
        $region19: #{tpu_custom_call.1} parent=15 // pred_region
          %s114 = sand.u32 %s46, 1
          %s115 = scalar_lea.sflag [#allocation3], %s114
          %s116 = sand.u32 %s46, 1
          %s117 = smul.addr %s116, 16
          %s118 = scalar_lea.vmem [#allocation2], %s117
          %s120 = ssub.s32 256, 256
          %121 = vsyncadd %s115, %s120
          %s122 = smul.addr %s21, 2
          %s123 = sadd.s32 %s22, %s122
          %s124 = smul.addr %s20, 4
          %s125 = sadd.s32 %s123, %s124
          %s126 = smul.addr %s125, 128
          %s127 = scalar_lea.hbm %s0, %s126
          %s128 = sshll.u32 %s118, 4
          %s129 = int_to_ptr.vmem [resolvable:$true] %s128
          %134 = dma.hbm_to_vmem [thread:$0]  %s127, 256, %s129, %s115, 128, 128, 8
        $region20: #{tpu_custom_call.1} parent=15 // pred_fallthru
          _
      $region16: #{tpu_custom_call.1} parent=5 // pred_fallthru
        _
      %p135 = scmp.le.s32.totalorder 1, %s13
      %p136 = scmp.lt.s32.totalorder %s13, 5
      %p137 = pnand %p135, %p136
      %p138 = pneg %p137
      // Predicated region
      $region21: #{tpu_custom_call.1} parent=5 // pred_check
        _
      $region22: #{tpu_custom_call.1} parent=5 // pred_check_branch
        %140 = sbr.rel (%p137) target = $region24
      $region23: #{tpu_custom_call.1} parent=5 // pred_region
        %s141 = ssub.s32 %s13, 1
        %s142 = sand.u32 %s49, 1
        %s143 = scalar_lea.sflag [#allocation3], %s142
        %s144 = sand.u32 %s49, 1
        %s145 = smul.addr %s144, 16
        %s146 = scalar_lea.vmem [#allocation2], %s145
        // Predicated region
        $region25: #{tpu_custom_call.1} parent=23 // pred_check
          %p147 = pneg %p62
        $region26: #{tpu_custom_call.1} parent=23 // pred_check_branch
          %149 = sbr.rel (%p147) target = $region28
        $region27: #{tpu_custom_call.1} parent=23 // pred_region
          %150 = dma.done %s143, 256
        $region28: #{tpu_custom_call.1} parent=23 // pred_fallthru
          _
        %s151 = sand.u32 %s49, 1
        %s152 = scalar_lea.sflag [#allocation3], %s151
        %s153 = sand.u32 %s49, 1
        %s154 = smul.addr %s153, 16
        %s155 = scalar_lea.vmem [#allocation2], %s154
        %p156 = pneg %p62
        %p157 = pneg %p59
        %p158 = pneg %p92
        %p159 = pneg %p89
        %s160 = sand.u32 %s79, 1
        %s161 = scalar_lea.sflag [#allocation4], %s160
        %s162 = sand.u32 %s79, 1
        %s163 = smul.addr %s162, 16
        %s164 = scalar_lea.vmem [#allocation5], %s163
        %v165 = vld [vmem:[%s146] sm:$0xff]
        %v166 = vld [vmem:[%s146 + $0x8] sm:$0xff]
        %v167 = vadd.f32 %v165, %v166
        %v168 = vadd.f32 %v167, 0.0001
        %v169 = vrcp.pop %v168
        %v170 = vmul.f32 %v165, %v169
        %v171 = vmul.f32 %v166, %v169
        %172 = vst [vmem:[%s164] sm:$0xff] %v170
        %173 = vst [vmem:[%s164 + $0x8] sm:$0xff] %v171
        %s174 = sand.u32 %s79, 1
        %s175 = scalar_lea.sflag [#allocation4], %s174
        %s176 = sand.u32 %s79, 1
        %s177 = smul.addr %s176, 16
        %s178 = scalar_lea.vmem [#allocation5], %s177
        // Predicated region
        $region29: #{tpu_custom_call.1} parent=23 // pred_check
          %p179 = pneg %p89
        $region30: #{tpu_custom_call.1} parent=23 // pred_check_branch
          %181 = sbr.rel (%p179) target = $region32
        $region31: #{tpu_custom_call.1} parent=23 // pred_region
          %s183 = ssub.s32 256, 256
          %184 = vsyncadd %s175, %s183
          %s185 = smul.addr %s24, 2
          %s186 = sadd.s32 %s25, %s185
          %s187 = smul.addr %s23, 4
          %s188 = sadd.s32 %s186, %s187
          %s189 = smul.addr %s188, 128
          %s190 = scalar_lea.hbm %s1, %s189
          %s191 = sshll.u32 %s178, 4
          %s192 = int_to_ptr.vmem [resolvable:$true] %s191
          %197 = dma.vmem_to_hbm [thread:$0]  %s192, 256, %s190, %s175, 128, 128, 8
        $region32: #{tpu_custom_call.1} parent=23 // pred_fallthru
          _
      $region24: #{tpu_custom_call.1} parent=5 // pred_fallthru
        _
      %p198 = scmp.le.s32.totalorder 2, %s13
      // Predicated region
      $region33: #{tpu_custom_call.1} parent=5 // pred_check
        %p199 = pneg %p198
      $region34: #{tpu_custom_call.1} parent=5 // pred_check_branch
        %201 = sbr.rel (%p199) target = $region36
      $region35: #{tpu_custom_call.1} parent=5 // pred_region
        %s202 = ssub.s32 %s13, 2
        // Predicated region
        $region37: #{tpu_custom_call.1} parent=35 // pred_check
          %p203 = pneg %p95
        $region38: #{tpu_custom_call.1} parent=35 // pred_check_branch
          %205 = sbr.rel (%p203) target = $region40
        $region39: #{tpu_custom_call.1} parent=35 // pred_region
          %s206 = sand.u32 %s80, 1
          %s207 = scalar_lea.sflag [#allocation4], %s206
          %s208 = sand.u32 %s80, 1
          %s209 = smul.addr %s208, 16
          %s210 = scalar_lea.vmem [#allocation5], %s209
          %211 = dma.done %s207, 256
        $region40: #{tpu_custom_call.1} parent=35 // pred_fallthru
          _
      $region36: #{tpu_custom_call.1} parent=5 // pred_fallthru
        _
    $region6: #{tpu_custom_call.1} parent=1 // loop_footer
      %s17 = sadd.s32 1, %s13
    $region7: #{tpu_custom_call.1} parent=1 // loop_footer_branch
      %12 = sbr.rel target = $region3
    $region8: #{tpu_custom_call.1} parent=1 // loop_exit
      _
    %212 = vsyncpa [#allocation3], 1
    %s213 = scalar_lea.sflag [#allocation3], 1
    %214 = vsyncpa %s213, 1
    %215 = vsyncpa [#allocation4], 1
    %s216 = scalar_lea.sflag [#allocation4], 1
    %217 = vsyncpa %s216, 1

</llo_original>
